<compile_context>
chip_gen: v5e
topology: v5e:2x2
jax: 0.10.0
libtpu: 0.0.40
codegen_flags: <defaults>
</compile_context>

<pallas_src>
import functools

import jax
import jax.numpy as jnp
from jax.experimental import pallas as pl
from jax.experimental.pallas import tpu as pltpu


# ----------------------------- Pallas kernel ------------------------------- #
def fused_gcn_kernel(a_ref, x_ref, w_ref, b_ref, o_ref, z_ref, h_ref,
                     *, num_layers, row_tile):
    s = pl.program_id(0)   # layer index (outer / slowest)
    r = pl.program_id(1)   # node-row tile index

    # Layer prologue (first row tile only): one full-width feature transform
    # Z = H_in @ W_s on the MXU.  H_in is X for layer 0, otherwise the
    # previous layer's activations held in VMEM scratch.
    @pl.when(r == 0)
    def _prologue():
        @pl.when(s == 0)
        def _seed():
            h_ref[...] = x_ref[...]

        z_ref[...] = jnp.dot(h_ref[...], w_ref[...],
                             preferred_element_type=jnp.float32)

    # Aggregate this tile of nodes: A_hat[rows] @ Z, then epilogue.
    agg = jnp.dot(a_ref[...], z_ref[...],
                  preferred_element_type=jnp.float32) + b_ref[...]

    row0 = pl.multiple_of(r * row_tile, row_tile)

    @pl.when(s < num_layers - 1)          # hidden layers: ReLU, keep for next layer
    def _hidden():
        act = jnp.maximum(agg, 0.0)
        h_ref[pl.ds(row0, row_tile), :] = act
        o_ref[...] = act.astype(o_ref.dtype)

    @pl.when(s == num_layers - 1)         # output layer: no activation
    def _final():
        o_ref[...] = agg.astype(o_ref.dtype)


def _round_up(x, m):
    return (x + m - 1) // m * m


def fused_gcn_forward(a_hat, x, weights, biases, *, row_tile=256):
    """Fused L-layer GCN: out = GCN_L(...ReLU(GCN_1(x))...), single pallas_call."""
    num_layers = len(weights)
    n, f_in = x.shape
    dims = [f_in] + [w.shape[1] for w in weights]

    f_pad = _round_up(max(dims), 128)          # lane-dense feature width
    n_pad = _round_up(n, 128)                  # lane-dense adjacency width
    tm = min(row_tile, n_pad)                  # node-row tile (sublane axis)
    assert n_pad % tm == 0 and tm % 8 == 0

    f32 = jnp.float32
    a_pad = jnp.zeros((n_pad, n_pad), f32).at[:n, :n].set(a_hat.astype(f32))
    x_pad = jnp.zeros((n_pad, f_pad), f32).at[:n, :f_in].set(x.astype(f32))
    w_stack = jnp.stack([
        jnp.zeros((f_pad, f_pad), f32).at[:w.shape[0], :w.shape[1]].set(w)
        for w in weights])
    b_stack = jnp.stack([
        jnp.zeros((1, f_pad), f32).at[:, :b.shape[-1]].set(b.reshape(1, -1))
        for b in biases])

    grid = (num_layers, n_pad // tm)

    # VMEM footprint: double-buffered pipelined operands + persistent scratch,
    # with a floor so the compiler has headroom; stays far below v7x's 64 MiB.
    dbl = 2 * 4 * (tm * n_pad          # A_hat row tile
                   + n_pad * f_pad     # X (resident)
                   + f_pad * f_pad     # W_s
                   + f_pad             # b_s
                   + tm * f_pad)       # output tile
    scratch = 2 * 4 * n_pad * f_pad    # Z + H activations
    vmem_bytes = min(max(dbl + scratch + (2 << 20), 16 << 20), 128 << 20)

    flops = num_layers * (2 * n_pad * f_pad * f_pad + 2 * n_pad * n_pad * f_pad)
    bytes_accessed = 4 * (num_layers * n_pad * n_pad            # A streamed per layer
                          + n_pad * f_pad                       # X
                          + num_layers * (f_pad * f_pad + f_pad)  # weights + biases
                          + n_pad * f_pad)                      # output

    out_pad = pl.pallas_call(
        functools.partial(fused_gcn_kernel, num_layers=num_layers, row_tile=tm),
        out_shape=jax.ShapeDtypeStruct((n_pad, f_pad), f32),
        grid_spec=pltpu.PrefetchScalarGridSpec(
            num_scalar_prefetch=0,
            grid=grid,
            in_specs=[
                pl.BlockSpec((tm, n_pad), lambda s, r: (r, 0)),            # A_hat rows
                pl.BlockSpec((n_pad, f_pad), lambda s, r: (0, 0)),         # X (resident)
                pl.BlockSpec((None, f_pad, f_pad), lambda s, r: (s, 0, 0)),  # W_s
                pl.BlockSpec((None, 1, f_pad), lambda s, r: (s, 0, 0)),      # b_s
            ],
            out_specs=pl.BlockSpec((tm, f_pad), lambda s, r: (r, 0)),
            scratch_shapes=[
                pltpu.VMEM((n_pad, f_pad), jnp.float32),   # Z = H_in @ W_s
                pltpu.VMEM((n_pad, f_pad), jnp.float32),   # H = layer activations
            ],
        ),
        compiler_params=pltpu.CompilerParams(
            dimension_semantics=("arbitrary", "arbitrary"),
            vmem_limit_bytes=int(vmem_bytes),
        ),
        cost_estimate=pl.CostEstimate(flops=int(flops), transcendentals=0,
                                      bytes_accessed=int(bytes_accessed)),
    )(a_pad, x_pad, w_stack, b_stack)

    return out_pad[:n, :weights[-1].shape[1]]


# ------------------------------- Graph glue -------------------------------- #
def normalized_adjacency(edge_index, num_nodes):
    """Dense D^-1/2 (A + I) D^-1/2, matching GCNConv's gcn_norm."""
    src = edge_index[0]
    dst = edge_index[1]
    a = jnp.zeros((num_nodes, num_nodes), jnp.float32)
    a = a.at[dst, src].add(1.0)            # message flows src -> dst (dst rows)
    a = a + jnp.eye(num_nodes, dtype=jnp.float32)
    deg = a.sum(axis=1)
    d_inv_sqrt = 1.0 / jnp.sqrt(deg)       # deg >= 1 thanks to self loops
    return d_inv_sqrt[:, None] * a * d_inv_sqrt[None, :]


def glorot(key, shape):
    fan_in, fan_out = shape
    limit = jnp.sqrt(6.0 / (fan_in + fan_out))
    return jax.random.uniform(key, shape, jnp.float32, -limit, limit)


def init_params(key, input_dim, hidden_dim, output_dim, num_layers=3):
    dims = [input_dim] + [hidden_dim] * (num_layers - 1) + [output_dim]
    params = []
    for i in range(num_layers):
        key, sub = jax.random.split(key)
        w = glorot(sub, (dims[i], dims[i + 1]))
        b = jnp.zeros((1, dims[i + 1]), jnp.float32)   # GCNConv bias init = zeros
        params.append((w, b))
    return params


def multilayer_gcn_forward(x, edge_index, params, *, row_tile=256):
    n = x.shape[0]
    a_hat = normalized_adjacency(edge_index, n)
    weights = [w for w, _ in params]
    biases = [b for _, b in params]
    # hidden layers: GCNConv -> ReLU -> Dropout(eval: identity); output: GCNConv
    return fused_gcn_forward(a_hat, x, weights, biases, row_tile=row_tile)


def _reference_forward(x, edge_index, params):
    a_hat = normalized_adjacency(edge_index, x.shape[0])
    h = x
    for w, b in params[:-1]:
        h = jnp.maximum(a_hat @ (h @ w) + b, 0.0)
    w, b = params[-1]
    return a_hat @ (h @ w) + b


# ---------------------------------- main ----------------------------------- #
if __name__ == "__main__":
    N = 16          # number of graph nodes
    E = 32          # number of (directed) edges
    INPUT_DIM = 8
    HIDDEN_DIM = 32
    OUTPUT_DIM = 4
    NUM_LAYERS = 3

    key = jax.random.PRNGKey(0)
    kx, ke, kp = jax.random.split(key, 3)

    x = jax.random.normal(kx, (N, INPUT_DIM), jnp.float32)
    edge_index = jax.random.randint(ke, (2, E), 0, N, jnp.int32)

    params = init_params(kp, INPUT_DIM, HIDDEN_DIM, OUTPUT_DIM, NUM_LAYERS)

    # row_tile=64 with N padded to 128 exercises the (layer, row-tile) grid.
    out = multilayer_gcn_forward(x, edge_index, params, row_tile=64)
    out = jax.block_until_ready(out)
    assert out.shape == (N, OUTPUT_DIM)

    ref = jax.block_until_ready(_reference_forward(x, edge_index, params))
    assert jnp.allclose(out, ref, atol=1e-3, rtol=1e-3), "mismatch vs JAX reference"

    print("KERNEL_OK")
</pallas_src>

<mosaic_0001>
module attributes {stable_mosaic.version = 11 : i64} {
  func.func @fused_gcn_kernel(%arg0: i32, %arg1: i32, %arg2: memref<64x128xf32, #tpu.memory_space<vmem>>, %arg3: memref<128x128xf32, #tpu.memory_space<vmem>>, %arg4: memref<1x128x128xf32, #tpu.memory_space<vmem>>, %arg5: memref<1x1x128xf32, #tpu.memory_space<vmem>>, %arg6: memref<64x128xf32, #tpu.memory_space<vmem>>, %arg7: memref<128x128xf32, #tpu.memory_space<vmem>>, %arg8: memref<128x128xf32, #tpu.memory_space<vmem>>) attributes {dimension_semantics = [#tpu.dimension_semantics<arbitrary>, #tpu.dimension_semantics<arbitrary>], iteration_bounds = array<i64: 3, 2>, scalar_prefetch = 0 : i64, scratch_operands = 2 : i64, tpu.core_type = #tpu.core_type<tc>, window_params = [{transform_indices = @transform_0, window_bounds = array<i64: 64, 128>}, {pipeline_mode = #tpu.pipeline_mode<synchronous>, transform_indices = @transform_1, window_bounds = array<i64: 128, 128>}, {transform_indices = @transform_2, window_bounds = array<i64: 1, 128, 128>}, {transform_indices = @transform_3, window_bounds = array<i64: 1, 1, 128>}, {transform_indices = @transform_4, window_bounds = array<i64: 64, 128>}]} {
    %c0_i32 = arith.constant 0 : i32
    %0 = arith.cmpi eq, %arg1, %c0_i32 : i32
    %1 = arith.extui %0 : i1 to i32
    %c0_i32_0 = arith.constant 0 : i32
    %2 = arith.cmpi ne, %1, %c0_i32_0 : i32
    scf.if %2 {
      %c0_i32_10 = arith.constant 0 : i32
      %18 = arith.cmpi eq, %arg0, %c0_i32_10 : i32
      %19 = arith.extui %18 : i1 to i32
      %c0_i32_11 = arith.constant 0 : i32
      %20 = arith.cmpi ne, %19, %c0_i32_11 : i32
      scf.if %20 {
        %c0_20 = arith.constant 0 : index
        %c0_21 = arith.constant 0 : index
        %26 = vector.load %arg3[%c0_20, %c0_21] : memref<128x128xf32, #tpu.memory_space<vmem>>, vector<128x128xf32>
        %c0_22 = arith.constant 0 : index
        %c0_23 = arith.constant 0 : index
        %27 = vector.load %arg8[%c0_22, %c0_23] : memref<128x128xf32, #tpu.memory_space<vmem>>, vector<128x128xf32>
        tpu.vector_store %arg8[%c0_22, %c0_23], %26 {strides = array<i32>} : memref<128x128xf32, #tpu.memory_space<vmem>>, vector<128x128xf32>,
      } else {
      }
      %c0_12 = arith.constant 0 : index
      %c0_13 = arith.constant 0 : index
      %21 = vector.load %arg8[%c0_12, %c0_13] : memref<128x128xf32, #tpu.memory_space<vmem>>, vector<128x128xf32>
      %c0_14 = arith.constant 0 : index
      %c0_15 = arith.constant 0 : index
      %c0_16 = arith.constant 0 : index
      %22 = vector.load %arg4[%c0_14, %c0_15, %c0_16] : memref<1x128x128xf32, #tpu.memory_space<vmem>>, vector<1x128x128xf32>
      %23 = vector.shape_cast %22 : vector<1x128x128xf32> to vector<128x128xf32>
      %cst_17 = arith.constant dense<0.000000e+00> : vector<128x128xf32>
      %24 = tpu.matmul %21, %23, %cst_17 {dimension_numbers = #tpu.dot_dimension_numbers<[1], [0], [0], [1], [0, 0, 1, 1], [], []>} : vector<128x128xf32>, vector<128x128xf32>, vector<128x128xf32> -> vector<128x128xf32>
      %c0_18 = arith.constant 0 : index
      %c0_19 = arith.constant 0 : index
      %25 = vector.load %arg7[%c0_18, %c0_19] : memref<128x128xf32, #tpu.memory_space<vmem>>, vector<128x128xf32>
      tpu.vector_store %arg7[%c0_18, %c0_19], %24 {strides = array<i32>} : memref<128x128xf32, #tpu.memory_space<vmem>>, vector<128x128xf32>,
    } else {
    }
    %c0 = arith.constant 0 : index
    %c0_1 = arith.constant 0 : index
    %3 = vector.load %arg2[%c0, %c0_1] : memref<64x128xf32, #tpu.memory_space<vmem>>, vector<64x128xf32>
    %c0_2 = arith.constant 0 : index
    %c0_3 = arith.constant 0 : index
    %4 = vector.load %arg7[%c0_2, %c0_3] : memref<128x128xf32, #tpu.memory_space<vmem>>, vector<128x128xf32>
    %cst = arith.constant dense<0.000000e+00> : vector<64x128xf32>
    %5 = tpu.matmul %3, %4, %cst {dimension_numbers = #tpu.dot_dimension_numbers<[1], [0], [0], [1], [0, 0, 1, 1], [], []>} : vector<64x128xf32>, vector<128x128xf32>, vector<64x128xf32> -> vector<64x128xf32>
    %c0_4 = arith.constant 0 : index
    %c0_5 = arith.constant 0 : index
    %c0_6 = arith.constant 0 : index
    %6 = vector.load %arg5[%c0_4, %c0_5, %c0_6] : memref<1x1x128xf32, #tpu.memory_space<vmem>>, vector<1x1x128xf32>
    %7 = vector.shape_cast %6 : vector<1x1x128xf32> to vector<1x128xf32>
    %8 = vector.broadcast %7 : vector<1x128xf32> to vector<64x128xf32>
    %9 = arith.addf %5, %8 : vector<64x128xf32>
    %c64_i32 = arith.constant 64 : i32
    %10 = arith.muli %arg1, %c64_i32 : i32
    %11 = tpu.assume_multiple %10, 64 : i32
    %c2_i32 = arith.constant 2 : i32
    %12 = arith.cmpi slt, %arg0, %c2_i32 : i32
    %13 = arith.extui %12 : i1 to i32
    %c0_i32_7 = arith.constant 0 : i32
    %14 = arith.cmpi ne, %13, %c0_i32_7 : i32
    scf.if %14 {
      %cst_10 = arith.constant 0.000000e+00 : f32
      %18 = vector.broadcast %cst_10 : f32 to vector<64x128xf32>
      %19 = arith.maximumf %9, %18 : vector<64x128xf32>
      %20 = arith.index_cast %11 : i32 to index
      %c0_11 = arith.constant 0 : index
      %21 = vector.load %arg8[%20, %c0_11] : memref<128x128xf32, #tpu.memory_space<vmem>>, vector<64x128xf32>
      tpu.vector_store %arg8[%20, %c0_11], %19 {strides = array<i32>} : memref<128x128xf32, #tpu.memory_space<vmem>>, vector<64x128xf32>,
      %c0_12 = arith.constant 0 : index
      %c0_13 = arith.constant 0 : index
      %22 = vector.load %arg6[%c0_12, %c0_13] : memref<64x128xf32, #tpu.memory_space<vmem>>, vector<64x128xf32>
      tpu.vector_store %arg6[%c0_12, %c0_13], %19 {strides = array<i32>} : memref<64x128xf32, #tpu.memory_space<vmem>>, vector<64x128xf32>,
    } else {
    }
    %c2_i32_8 = arith.constant 2 : i32
    %15 = arith.cmpi eq, %arg0, %c2_i32_8 : i32
    %16 = arith.extui %15 : i1 to i32
    %c0_i32_9 = arith.constant 0 : i32
    %17 = arith.cmpi ne, %16, %c0_i32_9 : i32
    scf.if %17 {
      %c0_10 = arith.constant 0 : index
      %c0_11 = arith.constant 0 : index
      %18 = vector.load %arg6[%c0_10, %c0_11] : memref<64x128xf32, #tpu.memory_space<vmem>>, vector<64x128xf32>
      tpu.vector_store %arg6[%c0_10, %c0_11], %9 {strides = array<i32>} : memref<64x128xf32, #tpu.memory_space<vmem>>, vector<64x128xf32>,
    } else {
    }
    return
  }
  func.func @transform_0(%arg0: i32, %arg1: i32) -> (i32, i32) {
    %c0_i32 = arith.constant 0 : i32
    %c0_i32_0 = arith.constant 0 : i32
    return %arg1, %c0_i32 : i32, i32
  }
  func.func @transform_1(%arg0: i32, %arg1: i32) -> (i32, i32) {
    %c0_i32 = arith.constant 0 : i32
    %c0_i32_0 = arith.constant 0 : i32
    %c0_i32_1 = arith.constant 0 : i32
    return %c0_i32, %c0_i32_0 : i32, i32
  }
  func.func @transform_2(%arg0: i32, %arg1: i32) -> (i32, i32, i32) {
    %c0_i32 = arith.constant 0 : i32
    %c0_i32_0 = arith.constant 0 : i32
    %c0_i32_1 = arith.constant 0 : i32
    return %arg0, %c0_i32, %c0_i32_0 : i32, i32, i32
  }
  func.func @transform_3(%arg0: i32, %arg1: i32) -> (i32, i32, i32) {
    %c0_i32 = arith.constant 0 : i32
    %c0_i32_0 = arith.constant 0 : i32
    %c0_i32_1 = arith.constant 0 : i32
    return %arg0, %c0_i32, %c0_i32_0 : i32, i32, i32
  }
  func.func @transform_4(%arg0: i32, %arg1: i32) -> (i32, i32) {
    %c0_i32 = arith.constant 0 : i32
    %c0_i32_0 = arith.constant 0 : i32
    return %arg1, %c0_i32 : i32, i32
  }
}

</mosaic_0001>

<llo_original>
// kernel: tpu_custom_call.1
$region0: #{tpu_custom_call.1}
  #allocation0 [shape = 'u32[]', space=smem, size = 0x4, offset = 0x4, fixed_abs, tag = 'smem constant byte address 0x4 - core index']
  #allocation1 [shape = 'u32[72,128]{1,0:T(1,128)}', space=vmem, size = 0x9000, scoped, tag = 'internal scratch']
  #allocation2 [shape = 'f32[128,128]{1,0:T(8,128)}', space=vmem, size = 0x10000, scoped, tag = 'scratch operand']
  #allocation3 [shape = 'f32[128,128]{1,0:T(8,128)}', space=vmem, size = 0x10000, scoped, tag = 'scratch operand']
  %s0 = inlined_call_operand.hbm [shape: f32[128,128], index: 0, kind: input, shape index: {}]
  %s1 = inlined_call_operand.hbm [shape: f32[128,128], index: 1, kind: input, shape index: {}]
  %s2 = inlined_call_operand.hbm [shape: f32[3,128,128], index: 2, kind: input, shape index: {}]
  %s3 = inlined_call_operand.hbm [shape: f32[3,1,128], index: 3, kind: input, shape index: {}]
  %s4 = inlined_call_operand.hbm [shape: f32[128,128], index: 4, kind: output, shape index: {}]
  %s5 = sld [smem:[#allocation0]]
  $region81: #{tpu_custom_call.1} parent=0
    _
  %s7 = ssub.s32 1, %s5
  %s8 = scalar_select 0, %s7, %s5
  $region1: #{tpu_custom_call.1} parent=0
    #allocation4 [shape = 'u8[65536]{0}', space=vmem, size = 0x10000, scoped, tag = 'input window, operand 0']
    #allocation5 [shape = 's32[2]{0}', space=sflag, size = 0x8, scoped, tag = 'scoped memory for tpu_custom_call.1']
    #allocation6 [shape = 's32[2]{0}', space=sflag, size = 0x8, scoped, tag = 'scoped memory for tpu_custom_call.1']
    #allocation7 [shape = 'u8[65536]{0}', space=vmem, size = 0x10000, scoped, tag = 'input window, operand 1, single buffered']
    #allocation8 [shape = 's32[1]{0}', space=sflag, size = 0x4, scoped, tag = 'scoped memory for tpu_custom_call.1']
    #allocation9 [shape = 'u8[131072]{0}', space=vmem, size = 0x20000, scoped, tag = 'input window, operand 2']
    #allocation10 [shape = 'u8[1024]{0}', space=vmem, size = 0x400, scoped, tag = 'input window, operand 3']
    #allocation11 [shape = 'u8[65536]{0}', space=vmem, size = 0x10000, scoped, tag = 'output window, operand 0']
    %9 = vsyncpa [#allocation5], 0
    %s10 = scalar_lea.sflag [#allocation5], 1
    %11 = vsyncpa %s10, 0
    %12 = vsyncpa [#allocation8], 0
    %13 = vsyncpa [#allocation6], 0
    %s14 = scalar_lea.sflag [#allocation6], 1
    %15 = vsyncpa %s14, 0
    loop: start=0, step=1, limit=8
    $region2: #{tpu_custom_call.1} parent=1 // loop_pre_header
      _
    $region3: #{tpu_custom_call.1} parent=1 // loop_header
      %s17 = sphi 0, %s21
      %p18 = scmp.ge.s32.totalorder %s17, 8
      %s24 = sphi 0, %s36
      %s25 = sphi 0, %s32
      %s26 = sphi 0, %s24
      %s27 = sphi 0, %s25
      %s28 = sphi 0, %s26
      %s29 = sphi 0, %s27
      %s39 = sphi 0, %s41
      %s42 = sphi 0, %s39
      %s43 = sphi 0, %s42
      %s59 = sphi 0, %s43
      %s63 = sphi 0, %s63
      %s65 = sphi 0, %s63
      %s66 = sphi 0, %s65
      %s80 = sphi 0, %s66
      %s86 = sphi 0, %s88
      %s89 = sphi 0, %s86
      %s90 = sphi 0, %s89
      %s106 = sphi 0, %s90
      %s112 = sphi 0, %s114
      %s115 = sphi 0, %s112
      %s116 = sphi 0, %s115
      %s132 = sphi 0, %s116
      %s138 = sphi 0, %s140
      %s141 = sphi 0, %s138
      %s142 = sphi 0, %s141
      %s158 = sphi 0, %s142
    $region4: #{tpu_custom_call.1} parent=1 // loop_header_branch
      %20 = sbr.rel (%p18) target = $region8
    $region5: #{tpu_custom_call.1} parent=1 // loop_body
      %s22 = ssub.s32 %s17, 1
      %s23 = ssub.s32 %s17, 2
      %s30 = sadd.s32 1, %s25
      %p31 = scmp.ge.s32.totalorder %s30, 2
      %s32 = scalar_select %p31, 0, %s30
      %s33 = sadd.s32 1, %s24
      %s34 = scalar_select %p31, %s33, %s24
      %p35 = scmp.ge.s32.totalorder %s34, 3
      %s36 = scalar_select %p35, 0, %s34
      %s37 = ssub.s32 %s25, %s32
      %p38 = scmp.eq.s32.totalorder %s37, 0
      %s40 = sadd.s32 %s39, 1
      %s41 = scalar_select %p38, %s39, %s40
      %p44 = pneg %p38
      %p45 = scmp.eq.s32.totalorder %s17, 5
      %p46 = por %p44, %p45
      %p47 = scmp.ne.s32.totalorder %s39, %s42
      %p48 = scmp.eq.s32.totalorder %s17, 0
      %p49 = por %p47, %p48
      %p50 = scmp.ne.s32.totalorder %s39, %s42
      %p51 = scmp.eq.s32.totalorder %s22, 5
      %p52 = por %p50, %p51
      %p53 = scmp.ne.s32.totalorder %s42, %s43
      %p54 = scmp.eq.s32.totalorder %s22, 0
      %p55 = por %p53, %p54
      %p56 = scmp.ne.s32.totalorder %s42, %s43
      %p57 = scmp.eq.s32.totalorder %s23, 5
      %p58 = por %p56, %p57
      %p60 = scmp.ne.s32.totalorder %s43, %s59
      %p61 = scmp.eq.s32.totalorder %s23, 0
      %p62 = por %p60, %p61
      %s64 = sadd.s32 %s63, 1
      %p67 = scmp.eq.s32.totalorder %s17, 5
      %p68 = scmp.ne.s32.totalorder %s63, %s65
      %p69 = scmp.eq.s32.totalorder %s17, 0
      %p70 = por %p68, %p69
      %p71 = scmp.ne.s32.totalorder %s63, %s65
      %p72 = scmp.eq.s32.totalorder %s22, 5
      %p73 = por %p71, %p72
      %p74 = scmp.ne.s32.totalorder %s65, %s66
      %p75 = scmp.eq.s32.totalorder %s22, 0
      %p76 = por %p74, %p75
      %p77 = scmp.ne.s32.totalorder %s65, %s66
      %p78 = scmp.eq.s32.totalorder %s23, 5
      %p79 = por %p77, %p78
      %p81 = scmp.ne.s32.totalorder %s66, %s80
      %p82 = scmp.eq.s32.totalorder %s23, 0
      %p83 = por %p81, %p82
      %s84 = ssub.s32 %s24, %s36
      %p85 = scmp.eq.s32.totalorder %s84, 0
      %s87 = sadd.s32 %s86, 1
      %s88 = scalar_select %p85, %s86, %s87
      %p91 = pneg %p85
      %p92 = scmp.eq.s32.totalorder %s17, 5
      %p93 = por %p91, %p92
      %p94 = scmp.ne.s32.totalorder %s86, %s89
      %p95 = scmp.eq.s32.totalorder %s17, 0
      %p96 = por %p94, %p95
      %p97 = scmp.ne.s32.totalorder %s86, %s89
      %p98 = scmp.eq.s32.totalorder %s22, 5
      %p99 = por %p97, %p98
      %p100 = scmp.ne.s32.totalorder %s89, %s90
      %p101 = scmp.eq.s32.totalorder %s22, 0
      %p102 = por %p100, %p101
      %p103 = scmp.ne.s32.totalorder %s89, %s90
      %p104 = scmp.eq.s32.totalorder %s23, 5
      %p105 = por %p103, %p104
      %p107 = scmp.ne.s32.totalorder %s90, %s106
      %p108 = scmp.eq.s32.totalorder %s23, 0
      %p109 = por %p107, %p108
      %s110 = ssub.s32 %s24, %s36
      %p111 = scmp.eq.s32.totalorder %s110, 0
      %s113 = sadd.s32 %s112, 1
      %s114 = scalar_select %p111, %s112, %s113
      %p117 = pneg %p111
      %p118 = scmp.eq.s32.totalorder %s17, 5
      %p119 = por %p117, %p118
      %p120 = scmp.ne.s32.totalorder %s112, %s115
      %p121 = scmp.eq.s32.totalorder %s17, 0
      %p122 = por %p120, %p121
      %p123 = scmp.ne.s32.totalorder %s112, %s115
      %p124 = scmp.eq.s32.totalorder %s22, 5
      %p125 = por %p123, %p124
      %p126 = scmp.ne.s32.totalorder %s115, %s116
      %p127 = scmp.eq.s32.totalorder %s22, 0
      %p128 = por %p126, %p127
      %p129 = scmp.ne.s32.totalorder %s115, %s116
      %p130 = scmp.eq.s32.totalorder %s23, 5
      %p131 = por %p129, %p130
      %p133 = scmp.ne.s32.totalorder %s116, %s132
      %p134 = scmp.eq.s32.totalorder %s23, 0
      %p135 = por %p133, %p134
      %s136 = ssub.s32 %s25, %s32
      %p137 = scmp.eq.s32.totalorder %s136, 0
      %s139 = sadd.s32 %s138, 1
      %s140 = scalar_select %p137, %s138, %s139
      %p143 = pneg %p137
      %p144 = scmp.eq.s32.totalorder %s17, 5
      %p145 = por %p143, %p144
      %p146 = scmp.ne.s32.totalorder %s138, %s141
      %p147 = scmp.eq.s32.totalorder %s17, 0
      %p148 = por %p146, %p147
      %p149 = scmp.ne.s32.totalorder %s138, %s141
      %p150 = scmp.eq.s32.totalorder %s22, 5
      %p151 = por %p149, %p150
      %p152 = scmp.ne.s32.totalorder %s141, %s142
      %p153 = scmp.eq.s32.totalorder %s22, 0
      %p154 = por %p152, %p153
      %p155 = scmp.ne.s32.totalorder %s141, %s142
      %p156 = scmp.eq.s32.totalorder %s23, 5
      %p157 = por %p155, %p156
      %p159 = scmp.ne.s32.totalorder %s142, %s158
      %p160 = scmp.eq.s32.totalorder %s23, 0
      %p161 = por %p159, %p160
      %p162 = scmp.le.s32.totalorder 1, %s17
      %p163 = scmp.lt.s32.totalorder %s17, 7
      %p164 = pnand %p162, %p163
      %p165 = pneg %p164
      // Predicated region
      $region9: #{tpu_custom_call.1} parent=5 // pred_check
        _
      $region10: #{tpu_custom_call.1} parent=5 // pred_check_branch
        %167 = sbr.rel (%p164) target = $region12
      $region11: #{tpu_custom_call.1} parent=5 // pred_region
        %s168 = ssub.s32 %s17, 1
        // Predicated region
        $region13: #{tpu_custom_call.1} parent=11 // pred_check
          %p169 = pneg %p76
        $region14: #{tpu_custom_call.1} parent=11 // pred_check_branch
          %171 = sbr.rel (%p169) target = $region16
        $region15: #{tpu_custom_call.1} parent=11 // pred_region
          %173 = vsyncadd [#allocation8], 0
          %s174 = sshll.u32 %s1, 4
          %s175 = int_to_ptr.hbm [resolvable:$true] %s174
          %s176 = sshll.u32 [#allocation7], 4
          %s177 = int_to_ptr.vmem [resolvable:$true] %s176
          %182 = dma.hbm_to_vmem [thread:$0]  %s175, 2048, %s177, [#allocation8], 128, 128, 8
        $region16: #{tpu_custom_call.1} parent=11 // pred_fallthru
          _
      $region12: #{tpu_custom_call.1} parent=5 // pred_fallthru
        _
      %p183 = scmp.lt.s32.totalorder %s17, 6
      // Predicated region
      $region17: #{tpu_custom_call.1} parent=5 // pred_check
        %p184 = pneg %p183
      $region18: #{tpu_custom_call.1} parent=5 // pred_check_branch
        %186 = sbr.rel (%p184) target = $region20
      $region19: #{tpu_custom_call.1} parent=5 // pred_region
        // Predicated region
        $region21: #{tpu_custom_call.1} parent=19 // pred_check
          %p187 = pneg %p49
        $region22: #{tpu_custom_call.1} parent=19 // pred_check_branch
          %189 = sbr.rel (%p187) target = $region24
        $region23: #{tpu_custom_call.1} parent=19 // pred_region
          %s190 = sand.u32 %s17, 1
          %s191 = scalar_lea.sflag [#allocation5], %s190
          %s192 = sand.u32 %s39, 1
          %s193 = smul.addr %s192, 64
          %s194 = scalar_lea.vmem [#allocation4], %s193
          %s195 = smul.u32 8, %s25
          %197 = vsyncadd %s191, 0
          %s198 = smul.addr %s195, 8
          %s199 = scalar_lea.hbm %s0, %s198
          %s200 = sshll.u32 %s199, 4
          %s201 = int_to_ptr.hbm [resolvable:$true] %s200
          %s202 = sshll.u32 %s194, 4
          %s203 = int_to_ptr.vmem [resolvable:$true] %s202
          %208 = dma.hbm_to_vmem [thread:$0]  %s201, 1024, %s203, %s191, 128, 128, 8
        $region24: #{tpu_custom_call.1} parent=19 // pred_fallthru
          _
        // Predicated region
        $region25: #{tpu_custom_call.1} parent=19 // pred_check
          %p209 = pneg %p96
        $region26: #{tpu_custom_call.1} parent=19 // pred_check_branch
          %211 = sbr.rel (%p209) target = $region28
        $region27: #{tpu_custom_call.1} parent=19 // pred_region
          %s212 = sand.u32 %s17, 1
          %s213 = scalar_lea.sflag [#allocation5], %s212
          %s214 = sand.u32 %s86, 1
          %s215 = smul.addr %s214, 128
          %s216 = scalar_lea.vmem [#allocation9], %s215
          %218 = vsyncadd %s213, 0
          %s219 = smul.addr %s24, 16
          %s220 = smul.addr %s219, 8
          %s221 = scalar_lea.hbm %s2, %s220
          %s222 = sshll.u32 %s221, 4
          %s223 = int_to_ptr.hbm [resolvable:$true] %s222
          %s224 = sshll.u32 %s216, 4
          %s225 = int_to_ptr.vmem [resolvable:$true] %s224
          %230 = dma.hbm_to_vmem [thread:$0]  %s223, 2048, %s225, %s213, 128, 128, 8
        $region28: #{tpu_custom_call.1} parent=19 // pred_fallthru
          _
        // Predicated region
        $region29: #{tpu_custom_call.1} parent=19 // pred_check
          %p231 = pneg %p122
        $region30: #{tpu_custom_call.1} parent=19 // pred_check_branch
          %233 = sbr.rel (%p231) target = $region32
        $region31: #{tpu_custom_call.1} parent=19 // pred_region
          %s234 = sand.u32 %s17, 1
          %s235 = scalar_lea.sflag [#allocation5], %s234
          %s236 = sand.u32 %s112, 1
          %s237 = scalar_lea.vmem [#allocation10], %s236
          %239 = vsyncadd %s235, 0
          %s240 = scalar_lea.hbm %s3, %s24
          %s242 = sshll.u32 %s240, 4
          %s243 = int_to_ptr.hbm [resolvable:$true] %s242
          %s244 = sshll.u32 %s237, 4
          %s245 = int_to_ptr.vmem [resolvable:$true] %s244
          %247 = dma.hbm_to_vmem [thread:$0]  %s243, 16, %s245, %s235
        $region32: #{tpu_custom_call.1} parent=19 // pred_fallthru
          _
      $region20: #{tpu_custom_call.1} parent=5 // pred_fallthru
        _
      %p248 = scmp.le.s32.totalorder 1, %s17
      %p249 = scmp.lt.s32.totalorder %s17, 7
      %p250 = pnand %p248, %p249
      %p251 = pneg %p250
      // Predicated region
      $region33: #{tpu_custom_call.1} parent=5 // pred_check
        _
      $region34: #{tpu_custom_call.1} parent=5 // pred_check_branch
        %253 = sbr.rel (%p250) target = $region36
      $region35: #{tpu_custom_call.1} parent=5 // pred_region
        %s254 = ssub.s32 %s17, 1
        %s255 = sand.u32 %s22, 1
        %s256 = scalar_lea.sflag [#allocation5], %s255
        %s257 = sand.u32 %s42, 1
        %s258 = smul.addr %s257, 64
        %s259 = scalar_lea.vmem [#allocation4], %s258
        // Predicated region
        $region37: #{tpu_custom_call.1} parent=35 // pred_check
          %p260 = pneg %p55
        $region38: #{tpu_custom_call.1} parent=35 // pred_check_branch
          %262 = sbr.rel (%p260) target = $region40
        $region39: #{tpu_custom_call.1} parent=35 // pred_region
          %264 = dma.done %s256, 1024
        $region40: #{tpu_custom_call.1} parent=35 // pred_fallthru
          _
        // Predicated region
        $region41: #{tpu_custom_call.1} parent=35 // pred_check
          %p265 = pneg %p76
        $region42: #{tpu_custom_call.1} parent=35 // pred_check_branch
          %267 = sbr.rel (%p265) target = $region44
        $region43: #{tpu_custom_call.1} parent=35 // pred_region
          %269 = dma.done [#allocation8], 2048
        $region44: #{tpu_custom_call.1} parent=35 // pred_fallthru
          _
        %s270 = sand.u32 %s22, 1
        %s271 = scalar_lea.sflag [#allocation5], %s270
        %s272 = sand.u32 %s89, 1
        %s273 = smul.addr %s272, 128
        %s274 = scalar_lea.vmem [#allocation9], %s273
        // Predicated region
        $region45: #{tpu_custom_call.1} parent=35 // pred_check
          %p275 = pneg %p102
        $region46: #{tpu_custom_call.1} parent=35 // pred_check_branch
          %277 = sbr.rel (%p275) target = $region48
        $region47: #{tpu_custom_call.1} parent=35 // pred_region
          %279 = dma.done %s271, 2048
        $region48: #{tpu_custom_call.1} parent=35 // pred_fallthru
          _
        %s280 = sand.u32 %s22, 1
        %s281 = scalar_lea.sflag [#allocation5], %s280
        %s282 = sand.u32 %s115, 1
        %s283 = scalar_lea.vmem [#allocation10], %s282
        // Predicated region
        $region49: #{tpu_custom_call.1} parent=35 // pred_check
          %p284 = pneg %p128
        $region50: #{tpu_custom_call.1} parent=35 // pred_check_branch
          %286 = sbr.rel (%p284) target = $region52
        $region51: #{tpu_custom_call.1} parent=35 // pred_region
          %288 = dma.done %s281, 16
        $region52: #{tpu_custom_call.1} parent=35 // pred_fallthru
          _
        %s289 = sand.u32 %s22, 1
        %s290 = scalar_lea.sflag [#allocation5], %s289
        %s291 = sand.u32 %s42, 1
        %s292 = smul.addr %s291, 64
        %s293 = scalar_lea.vmem [#allocation4], %s292
        %p294 = pneg %p55
        %p295 = pneg %p52
        %p296 = pneg %p76
        %p297 = pneg %p73
        %s298 = sand.u32 %s22, 1
        %s299 = scalar_lea.sflag [#allocation5], %s298
        %s300 = sand.u32 %s89, 1
        %s301 = smul.addr %s300, 128
        %s302 = scalar_lea.vmem [#allocation9], %s301
        %p303 = pneg %p102
        %p304 = pneg %p99
        %s305 = sand.u32 %s22, 1
        %s306 = scalar_lea.sflag [#allocation5], %s305
        %s307 = sand.u32 %s115, 1
        %s308 = scalar_lea.vmem [#allocation10], %s307
        %p309 = pneg %p128
        %p310 = pneg %p125
        %p311 = pneg %p154
        %p312 = pneg %p151
        %s313 = sand.u32 %s141, 1
        %s314 = scalar_lea.sflag [#allocation6], %s313
        %s315 = sand.u32 %s141, 1
        %s316 = smul.addr %s315, 64
        %s317 = scalar_lea.vmem [#allocation11], %s316
        %s318 = smul.u32 8, %s27
        %s319 = smul.u32 8, %s27
        %p320 = scmp.eq.s32.totalorder %s27, 0
        // Predicated region
        $region53: #{tpu_custom_call.1} parent=35 // pred_check
          %p321 = pneg %p320
        $region54: #{tpu_custom_call.1} parent=35 // pred_check_branch
          %323 = sbr.rel (%p321) target = $region56
        $region55: #{tpu_custom_call.1} parent=35 // pred_region
          %p324 = scmp.eq.s32.totalorder %s26, 0
          // Predicated region
          $region57: #{tpu_custom_call.1} parent=55 // pred_check
            %p325 = pneg %p324
          $region58: #{tpu_custom_call.1} parent=55 // pred_check_branch
            %327 = sbr.rel (%p325) target = $region60
          $region59: #{tpu_custom_call.1} parent=55 // pred_region
            %v328 = vld [vmem:[#allocation7] sm:$0xff]
            %v329 = vld [vmem:[#allocation7 + $0x8] sm:$0xff]
            %v330 = vld [vmem:[#allocation7 + $0x10] sm:$0xff]
            %v331 = vld [vmem:[#allocation7 + $0x18] sm:$0xff]
            %v332 = vld [vmem:[#allocation7 + $0x20] sm:$0xff]
            %v333 = vld [vmem:[#allocation7 + $0x28] sm:$0xff]
            %v334 = vld [vmem:[#allocation7 + $0x30] sm:$0xff]
            %v335 = vld [vmem:[#allocation7 + $0x38] sm:$0xff]
            %v336 = vld [vmem:[#allocation7 + $0x40] sm:$0xff]
            %v337 = vld [vmem:[#allocation7 + $0x48] sm:$0xff]
            %v338 = vld [vmem:[#allocation7 + $0x50] sm:$0xff]
            %v339 = vld [vmem:[#allocation7 + $0x58] sm:$0xff]
            %v340 = vld [vmem:[#allocation7 + $0x60] sm:$0xff]
            %v341 = vld [vmem:[#allocation7 + $0x68] sm:$0xff]
            %v342 = vld [vmem:[#allocation7 + $0x70] sm:$0xff]
            %v343 = vld [vmem:[#allocation7 + $0x78] sm:$0xff]
            %344 = vst [vmem:[#allocation3] sm:$0xff] %v328
            %345 = vst [vmem:[#allocation3 + $0x8] sm:$0xff] %v329
            %346 = vst [vmem:[#allocation3 + $0x10] sm:$0xff] %v330
            %347 = vst [vmem:[#allocation3 + $0x18] sm:$0xff] %v331
            %348 = vst [vmem:[#allocation3 + $0x20] sm:$0xff] %v332
            %349 = vst [vmem:[#allocation3 + $0x28] sm:$0xff] %v333
            %350 = vst [vmem:[#allocation3 + $0x30] sm:$0xff] %v334
            %351 = vst [vmem:[#allocation3 + $0x38] sm:$0xff] %v335
            %352 = vst [vmem:[#allocation3 + $0x40] sm:$0xff] %v336
            %353 = vst [vmem:[#allocation3 + $0x48] sm:$0xff] %v337
            %354 = vst [vmem:[#allocation3 + $0x50] sm:$0xff] %v338
            %355 = vst [vmem:[#allocation3 + $0x58] sm:$0xff] %v339
            %356 = vst [vmem:[#allocation3 + $0x60] sm:$0xff] %v340
            %357 = vst [vmem:[#allocation3 + $0x68] sm:$0xff] %v341
            %358 = vst [vmem:[#allocation3 + $0x70] sm:$0xff] %v342
            %359 = vst [vmem:[#allocation3 + $0x78] sm:$0xff] %v343
          $region60: #{tpu_custom_call.1} parent=55 // pred_fallthru
            _
          %v360 = vld [vmem:[#allocation3] sm:$0xff]
          %v361 = vld [vmem:[#allocation3 + $0x8] sm:$0xff]
          %v362 = vld [vmem:[#allocation3 + $0x10] sm:$0xff]
          %v363 = vld [vmem:[#allocation3 + $0x18] sm:$0xff]
          %v364 = vld [vmem:[#allocation3 + $0x20] sm:$0xff]
          %v365 = vld [vmem:[#allocation3 + $0x28] sm:$0xff]
          %v366 = vld [vmem:[#allocation3 + $0x30] sm:$0xff]
          %v367 = vld [vmem:[#allocation3 + $0x38] sm:$0xff]
          %v368 = vld [vmem:[#allocation3 + $0x40] sm:$0xff]
          %v369 = vld [vmem:[#allocation3 + $0x48] sm:$0xff]
          %v370 = vld [vmem:[#allocation3 + $0x50] sm:$0xff]
          %v371 = vld [vmem:[#allocation3 + $0x58] sm:$0xff]
          %v372 = vld [vmem:[#allocation3 + $0x60] sm:$0xff]
          %v373 = vld [vmem:[#allocation3 + $0x68] sm:$0xff]
          %v374 = vld [vmem:[#allocation3 + $0x70] sm:$0xff]
          %v375 = vld [vmem:[#allocation3 + $0x78] sm:$0xff]
          %v376 = vld [vmem:[%s274] sm:$0xff]
          %v377 = vld [vmem:[%s274 + $0x8] sm:$0xff]
          %v378 = vld [vmem:[%s274 + $0x10] sm:$0xff]
          %v379 = vld [vmem:[%s274 + $0x18] sm:$0xff]
          %v380 = vld [vmem:[%s274 + $0x20] sm:$0xff]
          %v381 = vld [vmem:[%s274 + $0x28] sm:$0xff]
          %v382 = vld [vmem:[%s274 + $0x30] sm:$0xff]
          %v383 = vld [vmem:[%s274 + $0x38] sm:$0xff]
          %v384 = vld [vmem:[%s274 + $0x40] sm:$0xff]
          %v385 = vld [vmem:[%s274 + $0x48] sm:$0xff]
          %v386 = vld [vmem:[%s274 + $0x50] sm:$0xff]
          %v387 = vld [vmem:[%s274 + $0x58] sm:$0xff]
          %v388 = vld [vmem:[%s274 + $0x60] sm:$0xff]
          %v389 = vld [vmem:[%s274 + $0x68] sm:$0xff]
          %v390 = vld [vmem:[%s274 + $0x70] sm:$0xff]
          %v391 = vld [vmem:[%s274 + $0x78] sm:$0xff]
          %392 = vmatpush.msra.mxu0 %v391
          %393 = vmatpush.msra.mxu0 %v390
          %394 = vmatpush.msra.mxu0 %v389
          %395 = vmatpush.msra.mxu0 %v388
          %396 = vmatpush.msra.mxu0 %v387
          %397 = vmatpush.msra.mxu0 %v386
          %398 = vmatpush.msra.mxu0 %v385
          %399 = vmatpush.msra.mxu0 %v384
          %400 = vmatpush.msra.mxu0 %v383
          %401 = vmatpush.msra.mxu0 %v382
          %402 = vmatpush.msra.mxu0 %v381
          %403 = vmatpush.msra.mxu0 %v380
          %404 = vmatpush.msra.mxu0 %v379
          %405 = vmatpush.msra.mxu0 %v378
          %406 = vmatpush.msra.mxu0 %v377
          %407 = vmatpush.msra.mxu0 %v376
          %408 = vmatmul.f32.gmra.mxu0 %v360
          %v409 = vpop.f32.mrf.mxu0
          %v410 = vadd.f32 0.0, %v409
          %411 = vmatmul.f32.gmra.mxu0 %v361
          %v412 = vpop.f32.mrf.mxu0
          %v413 = vadd.f32 0.0, %v412
          %414 = vmatmul.f32.gmra.mxu0 %v362
          %v415 = vpop.f32.mrf.mxu0
          %v416 = vadd.f32 0.0, %v415
          %417 = vmatmul.f32.gmra.mxu0 %v363
          %v418 = vpop.f32.mrf.mxu0
          %v419 = vadd.f32 0.0, %v418
          %420 = vmatmul.f32.gmra.mxu0 %v364
          %v421 = vpop.f32.mrf.mxu0
          %v422 = vadd.f32 0.0, %v421
          %423 = vmatmul.f32.gmra.mxu0 %v365
          %v424 = vpop.f32.mrf.mxu0
          %v425 = vadd.f32 0.0, %v424
          %426 = vmatmul.f32.gmra.mxu0 %v366
          %v427 = vpop.f32.mrf.mxu0
          %v428 = vadd.f32 0.0, %v427
          %429 = vmatmul.f32.gmra.mxu0 %v367
          %v430 = vpop.f32.mrf.mxu0
          %v431 = vadd.f32 0.0, %v430
          %432 = vmatmul.f32.gmra.mxu0 %v368
          %v433 = vpop.f32.mrf.mxu0
          %v434 = vadd.f32 0.0, %v433
          %435 = vmatmul.f32.gmra.mxu0 %v369
          %v436 = vpop.f32.mrf.mxu0
          %v437 = vadd.f32 0.0, %v436
          %438 = vmatmul.f32.gmra.mxu0 %v370
          %v439 = vpop.f32.mrf.mxu0
          %v440 = vadd.f32 0.0, %v439
          %441 = vmatmul.f32.gmra.mxu0 %v371
          %v442 = vpop.f32.mrf.mxu0
          %v443 = vadd.f32 0.0, %v442
          %444 = vmatmul.f32.gmra.mxu0 %v372
          %v445 = vpop.f32.mrf.mxu0
          %v446 = vadd.f32 0.0, %v445
          %447 = vmatmul.f32.gmra.mxu0 %v373
          %v448 = vpop.f32.mrf.mxu0
          %v449 = vadd.f32 0.0, %v448
          %450 = vmatmul.f32.gmra.mxu0 %v374
          %v451 = vpop.f32.mrf.mxu0
          %v452 = vadd.f32 0.0, %v451
          %453 = vmatmul.f32.gmra.mxu0 %v375
          %v454 = vpop.f32.mrf.mxu0
          %v455 = vadd.f32 0.0, %v454
          %456 = vdwg.mxu0
          %457 = vst [vmem:[#allocation2] sm:$0xff] %v410
          %458 = vst [vmem:[#allocation2 + $0x8] sm:$0xff] %v413
          %459 = vst [vmem:[#allocation2 + $0x10] sm:$0xff] %v416
          %460 = vst [vmem:[#allocation2 + $0x18] sm:$0xff] %v419
          %461 = vst [vmem:[#allocation2 + $0x20] sm:$0xff] %v422
          %462 = vst [vmem:[#allocation2 + $0x28] sm:$0xff] %v425
          %463 = vst [vmem:[#allocation2 + $0x30] sm:$0xff] %v428
          %464 = vst [vmem:[#allocation2 + $0x38] sm:$0xff] %v431
          %465 = vst [vmem:[#allocation2 + $0x40] sm:$0xff] %v434
          %466 = vst [vmem:[#allocation2 + $0x48] sm:$0xff] %v437
          %467 = vst [vmem:[#allocation2 + $0x50] sm:$0xff] %v440
          %468 = vst [vmem:[#allocation2 + $0x58] sm:$0xff] %v443
          %469 = vst [vmem:[#allocation2 + $0x60] sm:$0xff] %v446
          %470 = vst [vmem:[#allocation2 + $0x68] sm:$0xff] %v449
          %471 = vst [vmem:[#allocation2 + $0x70] sm:$0xff] %v452
          %472 = vst [vmem:[#allocation2 + $0x78] sm:$0xff] %v455
        $region56: #{tpu_custom_call.1} parent=35 // pred_fallthru
          _
        %v473 = vld [vmem:[%s259] sm:$0xff]
        %v474 = vld [vmem:[%s259 + $0x8] sm:$0xff]
        %v475 = vld [vmem:[%s259 + $0x10] sm:$0xff]
        %v476 = vld [vmem:[%s259 + $0x18] sm:$0xff]
        %v477 = vld [vmem:[%s259 + $0x20] sm:$0xff]
        %v478 = vld [vmem:[%s259 + $0x28] sm:$0xff]
        %v479 = vld [vmem:[%s259 + $0x30] sm:$0xff]
        %v480 = vld [vmem:[%s259 + $0x38] sm:$0xff]
        %v481 = vld [vmem:[#allocation2] sm:$0xff]
        %v482 = vld [vmem:[#allocation2 + $0x8] sm:$0xff]
        %v483 = vld [vmem:[#allocation2 + $0x10] sm:$0xff]
        %v484 = vld [vmem:[#allocation2 + $0x18] sm:$0xff]
        %v485 = vld [vmem:[#allocation2 + $0x20] sm:$0xff]
        %v486 = vld [vmem:[#allocation2 + $0x28] sm:$0xff]
        %v487 = vld [vmem:[#allocation2 + $0x30] sm:$0xff]
        %v488 = vld [vmem:[#allocation2 + $0x38] sm:$0xff]
        %v489 = vld [vmem:[#allocation2 + $0x40] sm:$0xff]
        %v490 = vld [vmem:[#allocation2 + $0x48] sm:$0xff]
        %v491 = vld [vmem:[#allocation2 + $0x50] sm:$0xff]
        %v492 = vld [vmem:[#allocation2 + $0x58] sm:$0xff]
        %v493 = vld [vmem:[#allocation2 + $0x60] sm:$0xff]
        %v494 = vld [vmem:[#allocation2 + $0x68] sm:$0xff]
        %v495 = vld [vmem:[#allocation2 + $0x70] sm:$0xff]
        %v496 = vld [vmem:[#allocation2 + $0x78] sm:$0xff]
        %v497 = vld [vmem:[%s283] sm:$0x1]
        %v499 = vperm.slane %v497, 0
        %501 = vmatpush.msra.mxu0 %v496
        %502 = vmatpush.msra.mxu0 %v495
        %503 = vmatpush.msra.mxu0 %v494
        %504 = vmatpush.msra.mxu0 %v493
        %505 = vmatpush.msra.mxu0 %v492
        %506 = vmatpush.msra.mxu0 %v491
        %507 = vmatpush.msra.mxu0 %v490
        %508 = vmatpush.msra.mxu0 %v489
        %509 = vmatpush.msra.mxu0 %v488
        %510 = vmatpush.msra.mxu0 %v487
        %511 = vmatpush.msra.mxu0 %v486
        %512 = vmatpush.msra.mxu0 %v485
        %513 = vmatpush.msra.mxu0 %v484
        %514 = vmatpush.msra.mxu0 %v483
        %515 = vmatpush.msra.mxu0 %v482
        %516 = vmatpush.msra.mxu0 %v481
        %517 = vmatmul.f32.gmra.mxu0 %v473
        %v518 = vpop.f32.mrf.mxu0
        %v519 = vadd.f32 %v499, %v518
        %520 = vmatmul.f32.gmra.mxu0 %v474
        %v521 = vpop.f32.mrf.mxu0
        %v522 = vadd.f32 %v499, %v521
        %523 = vmatmul.f32.gmra.mxu0 %v475
        %v524 = vpop.f32.mrf.mxu0
        %v525 = vadd.f32 %v499, %v524
        %526 = vmatmul.f32.gmra.mxu0 %v476
        %v527 = vpop.f32.mrf.mxu0
        %v528 = vadd.f32 %v499, %v527
        %529 = vmatmul.f32.gmra.mxu0 %v477
        %v530 = vpop.f32.mrf.mxu0
        %v531 = vadd.f32 %v499, %v530
        %532 = vmatmul.f32.gmra.mxu0 %v478
        %v533 = vpop.f32.mrf.mxu0
        %v534 = vadd.f32 %v499, %v533
        %535 = vmatmul.f32.gmra.mxu0 %v479
        %v536 = vpop.f32.mrf.mxu0
        %v537 = vadd.f32 %v499, %v536
        %538 = vmatmul.f32.gmra.mxu0 %v480
        %v539 = vpop.f32.mrf.mxu0
        %v540 = vadd.f32 %v499, %v539
        %541 = vdwg.mxu0
        %s542 = smul.u32 %s27, 64
        %p543 = scmp.lt.s32.totalorder %s26, 2
        // Predicated region
        $region61: #{tpu_custom_call.1} parent=35 // pred_check
          %p544 = pneg %p543
        $region62: #{tpu_custom_call.1} parent=35 // pred_check_branch
          %546 = sbr.rel (%p544) target = $region64
        $region63: #{tpu_custom_call.1} parent=35 // pred_region
          %v547 = vmax.f32 %v519, 0.0
          %v548 = vmax.f32 %v522, 0.0
          %v549 = vmax.f32 %v525, 0.0
          %v550 = vmax.f32 %v528, 0.0
          %v551 = vmax.f32 %v531, 0.0
          %v552 = vmax.f32 %v534, 0.0
          %v553 = vmax.f32 %v537, 0.0
          %v554 = vmax.f32 %v540, 0.0
          %s555 = scalar_lea.vmem [#allocation3], %s542
          %556 = vst [vmem:[%s555] sm:$0xff] %v547
          %557 = vst [vmem:[%s555 + $0x8] sm:$0xff] %v548
          %558 = vst [vmem:[%s555 + $0x10] sm:$0xff] %v549
          %559 = vst [vmem:[%s555 + $0x18] sm:$0xff] %v550
          %560 = vst [vmem:[%s555 + $0x20] sm:$0xff] %v551
          %561 = vst [vmem:[%s555 + $0x28] sm:$0xff] %v552
          %562 = vst [vmem:[%s555 + $0x30] sm:$0xff] %v553
          %563 = vst [vmem:[%s555 + $0x38] sm:$0xff] %v554
          %564 = vst [vmem:[%s317] sm:$0xff] %v547
          %565 = vst [vmem:[%s317 + $0x8] sm:$0xff] %v548
          %566 = vst [vmem:[%s317 + $0x10] sm:$0xff] %v549
          %567 = vst [vmem:[%s317 + $0x18] sm:$0xff] %v550
          %568 = vst [vmem:[%s317 + $0x20] sm:$0xff] %v551
          %569 = vst [vmem:[%s317 + $0x28] sm:$0xff] %v552
          %570 = vst [vmem:[%s317 + $0x30] sm:$0xff] %v553
          %571 = vst [vmem:[%s317 + $0x38] sm:$0xff] %v554
        $region64: #{tpu_custom_call.1} parent=35 // pred_fallthru
          _
        %p572 = scmp.eq.s32.totalorder %s26, 2
        // Predicated region
        $region65: #{tpu_custom_call.1} parent=35 // pred_check
          %p573 = pneg %p572
        $region66: #{tpu_custom_call.1} parent=35 // pred_check_branch
          %575 = sbr.rel (%p573) target = $region68
        $region67: #{tpu_custom_call.1} parent=35 // pred_region
          %576 = vst [vmem:[%s317] sm:$0xff] %v519
          %577 = vst [vmem:[%s317 + $0x8] sm:$0xff] %v522
          %578 = vst [vmem:[%s317 + $0x10] sm:$0xff] %v525
          %579 = vst [vmem:[%s317 + $0x18] sm:$0xff] %v528
          %580 = vst [vmem:[%s317 + $0x20] sm:$0xff] %v531
          %581 = vst [vmem:[%s317 + $0x28] sm:$0xff] %v534
          %582 = vst [vmem:[%s317 + $0x30] sm:$0xff] %v537
          %583 = vst [vmem:[%s317 + $0x38] sm:$0xff] %v540
        $region68: #{tpu_custom_call.1} parent=35 // pred_fallthru
          _
        %s584 = sand.u32 %s141, 1
        %s585 = scalar_lea.sflag [#allocation6], %s584
        %s586 = sand.u32 %s141, 1
        %s587 = smul.addr %s586, 64
        %s588 = scalar_lea.vmem [#allocation11], %s587
        // Predicated region
        $region69: #{tpu_custom_call.1} parent=35 // pred_check
          %p589 = pneg %p151
        $region70: #{tpu_custom_call.1} parent=35 // pred_check_branch
          %591 = sbr.rel (%p589) target = $region72
        $region71: #{tpu_custom_call.1} parent=35 // pred_region
          %s592 = smul.u32 8, %s27
          %594 = vsyncadd %s585, 0
          %s595 = smul.addr %s592, 8
          %s596 = scalar_lea.hbm %s4, %s595
          %s597 = sshll.u32 %s588, 4
          %s598 = int_to_ptr.vmem [resolvable:$true] %s597
          %s599 = sshll.u32 %s596, 4
          %s600 = int_to_ptr.hbm [resolvable:$true] %s599
          %605 = dma.vmem_to_hbm [thread:$0]  %s598, 1024, %s600, %s585, 128, 128, 8
        $region72: #{tpu_custom_call.1} parent=35 // pred_fallthru
          _
      $region36: #{tpu_custom_call.1} parent=5 // pred_fallthru
        _
      %p606 = scmp.le.s32.totalorder 2, %s17
      // Predicated region
      $region73: #{tpu_custom_call.1} parent=5 // pred_check
        %p607 = pneg %p606
      $region74: #{tpu_custom_call.1} parent=5 // pred_check_branch
        %609 = sbr.rel (%p607) target = $region76
      $region75: #{tpu_custom_call.1} parent=5 // pred_region
        %s610 = ssub.s32 %s17, 2
        // Predicated region
        $region77: #{tpu_custom_call.1} parent=75 // pred_check
          %p611 = pneg %p157
        $region78: #{tpu_custom_call.1} parent=75 // pred_check_branch
          %613 = sbr.rel (%p611) target = $region80
        $region79: #{tpu_custom_call.1} parent=75 // pred_region
          %s614 = sand.u32 %s142, 1
          %s615 = scalar_lea.sflag [#allocation6], %s614
          %s616 = sand.u32 %s142, 1
          %s617 = smul.addr %s616, 64
          %s618 = scalar_lea.vmem [#allocation11], %s617
          %620 = dma.done %s615, 1024
        $region80: #{tpu_custom_call.1} parent=75 // pred_fallthru
          _
      $region76: #{tpu_custom_call.1} parent=5 // pred_fallthru
        _
    $region6: #{tpu_custom_call.1} parent=1 // loop_footer
      %s21 = sadd.s32 1, %s17
    $region7: #{tpu_custom_call.1} parent=1 // loop_footer_branch
      %16 = sbr.rel target = $region3
    $region8: #{tpu_custom_call.1} parent=1 // loop_exit
      _
    %621 = vsyncpa [#allocation5], 1
    %s622 = scalar_lea.sflag [#allocation5], 1
    %623 = vsyncpa %s622, 1
    %624 = vsyncpa [#allocation8], 1
    %625 = vsyncpa [#allocation6], 1
    %s626 = scalar_lea.sflag [#allocation6], 1
    %627 = vsyncpa %s626, 1

</llo_original>
